<compile_context>
chip_gen: v7x
topology: tpu7x:2x2x1
jax: 0.10.0
libtpu: 0.0.40
codegen_flags: <defaults>
</compile_context>

<pallas_src>
import math
import functools

import jax
import jax.numpy as jnp
from jax.experimental import pallas as pl
from jax.experimental.pallas import tpu as pltpu


def _ru8(n):
    return ((n + 7) // 8) * 8


def _default_batch_blocks(batch):
    """Split the batch over both TensorCores on v7x, keep it folded elsewhere."""
    if batch < 2 or batch % 2 != 0:
        return 1
    try:
        kind = jax.devices()[0].device_kind.lower()
    except Exception:  # pragma: no cover
        return 1
    return 2 if "v7" in kind else 1


# ---------------------------------------------------------------------------
# One-time parameter packing (call-invariant): everything the kernel needs
# besides (x, styles) lives in a single f32 slab with lane width K*K*Cin.
# ---------------------------------------------------------------------------
def prepare_style_conv2d(params, *, kernel_size=3):
    weight = jnp.asarray(params["weight"], jnp.float32)        # (Cout, Cin, K, K)
    bias = jnp.asarray(params["bias"], jnp.float32)            # (Cout,)
    wa = jnp.asarray(params["affine_weight"], jnp.float32)     # (Cin, S)
    ba = jnp.asarray(params["affine_bias"], jnp.float32)       # (Cin,)

    Cout, Cin, K, _ = weight.shape
    assert K == kernel_size
    S = wa.shape[1]
    KKC = K * K * Cin

    # contraction index r = (i*K + j)*Cin + ci  (must match the im2col order)
    wslab = jnp.transpose(weight, (0, 2, 3, 1)).reshape(Cout, KKC)   # (Cout, KKC)
    wsq = wslab * wslab                                              # demod squares
    # lr-equalized affine (weight_gain = 1/sqrt(S)) replicated over the K*K taps
    waT_rep = jnp.tile(wa.T * (1.0 / math.sqrt(S)), (1, K * K))      # (S, KKC)
    ba_row = jnp.tile(ba, K * K).reshape(1, KKC)                     # (1, KKC)

    off_wa = 0
    off_ba = _ru8(S)
    off_w = off_ba + 8
    off_wsq = off_w + _ru8(Cout)
    off_bias = off_wsq + _ru8(Cout)
    slab_rows = off_bias + _ru8(Cout)

    slab = jnp.zeros((slab_rows, KKC), jnp.float32)
    slab = slab.at[off_wa:off_wa + S, :].set(waT_rep)
    slab = slab.at[off_ba:off_ba + 1, :].set(ba_row)
    slab = slab.at[off_w:off_w + Cout, :].set(wslab)
    slab = slab.at[off_wsq:off_wsq + Cout, :].set(wsq)
    slab = slab.at[off_bias:off_bias + Cout, 0:1].set(bias.reshape(Cout, 1))

    cfg = dict(k=K, cin=Cin, cout=Cout, s=S, kkc=KKC, slab_rows=slab_rows,
               off_wa=off_wa, off_ba=off_ba, off_w=off_w,
               off_wsq=off_wsq, off_bias=off_bias)
    return slab, cfg


# ---------------------------------------------------------------------------
# Kernel: one grid step handles `bpb` batch elements (all of them on a single
# TC; one each when the batch is split over the two v7x TensorCores).
# ---------------------------------------------------------------------------
def _style_conv2d_kernel(styles_ref, slab_ref, patches_ref, out_ref, *,
                         bpb, s_dim, cout, hw,
                         off_wa, off_ba, off_w, off_wsq, off_bias,
                         lrelu_alpha, act_gain, mxu_dtype):
    f32 = jnp.float32

    # ---- unpack the packed, call-invariant constant slab (static slices) ----
    waT_rep = slab_ref[off_wa:off_wa + s_dim, :]          # (S, KKC)
    ba_row = slab_ref[off_ba:off_ba + 1, :]               # (1, KKC)
    wslab = slab_ref[off_w:off_w + cout, :]               # (Cout, KKC)
    wsq = slab_ref[off_wsq:off_wsq + cout, :]             # (Cout, KKC)
    bias_col = slab_ref[off_bias:off_bias + cout, 0:1]    # (Cout, 1)

    # ---- affine for this core's batches (tiny, all f32: v5e-safe) ----
    styles_loc = styles_ref[0].astype(f32)                               # (bpb, S)
    s_rep = jnp.dot(styles_loc, waT_rep, preferred_element_type=f32)     # (bpb, KKC)
    s_rep = s_rep + ba_row

    # hoisted out of the unrolled batch loop (JAX does not CSE broadcasts)
    bias_full = jnp.broadcast_to(bias_col, (cout, hw))                   # (Cout, HW)
    pos_g = jnp.float32(act_gain)                 # lrelu gain fused into select
    neg_g = jnp.float32(act_gain * lrelu_alpha)

    for lb in range(bpb):                         # static unroll, bpb <= 2
        s_row = s_rep[lb:lb + 1, :]                                      # (1, KKC)
        # demodulation coefficient per output channel: rsqrt(sum_r (w*s)^2)
        d_col = jax.lax.rsqrt(
            jnp.sum(wsq * (s_row * s_row), axis=1, keepdims=True) + 1e-8)  # (Cout,1)
        # fold modulation + demod into the tiny weight slab (weight-side scaling)
        w_b = (wslab * s_row) * d_col                                    # (Cout, KKC)
        # one lane-dense MXU matmul: (Cout, KKC) @ (KKC, H*W) -> (Cout, H*W)
        y = jnp.dot(w_b.astype(mxu_dtype), patches_ref[lb],
                    preferred_element_type=f32)
        y = y + bias_full
        y = y * jnp.where(y >= 0.0, pos_g, neg_g)                        # lrelu*gain
        out_ref[lb] = y.astype(out_ref.dtype)


# ---------------------------------------------------------------------------
# Wrapper (jit this): im2col glue + a single pallas_call.
# ---------------------------------------------------------------------------
def style_conv2d(x_nchw, styles, slab, cfg, *, gain=1.0,
                 mxu_dtype=jnp.bfloat16, batch_blocks=None):
    """StyleConv2d forward (upsample=1, spatial_noise=False, lrelu)."""
    B, Cin, H, W = x_nchw.shape
    K, Cout, S, KKC = cfg["k"], cfg["cout"], cfg["s"], cfg["kkc"]
    assert Cin == cfg["cin"]
    HW = H * W
    pad = K // 2

    if batch_blocks is None:
        batch_blocks = _default_batch_blocks(B)
    if B % batch_blocks != 0:
        batch_blocks = 1
    bpb = B // batch_blocks

    # im2col patch matrix (B, K*K*Cin, H*W); contraction index r = (i*K+j)*Cin+ci.
    # Narrow dtype: the MXU is natively bf16 with f32 accumulation.
    xpad = jnp.pad(x_nchw, ((0, 0), (0, 0), (pad, pad), (pad, pad)))
    taps = [xpad[:, :, i:i + H, j:j + W] for i in range(K) for j in range(K)]
    patches = jnp.stack(taps, axis=1).reshape(B, KKC, HW).astype(mxu_dtype)

    # styles reshaped so each grid step gets exactly its batch slice (static).
    styles3 = styles.astype(jnp.float32).reshape(batch_blocks, bpb, S)

    kernel = functools.partial(
        _style_conv2d_kernel,
        bpb=bpb, s_dim=S, cout=Cout, hw=HW,
        off_wa=cfg["off_wa"], off_ba=cfg["off_ba"], off_w=cfg["off_w"],
        off_wsq=cfg["off_wsq"], off_bias=cfg["off_bias"],
        lrelu_alpha=0.2, act_gain=math.sqrt(2.0) * gain,   # lrelu def_gain * gain
        mxu_dtype=mxu_dtype)

    flops = 2 * B * Cout * KKC * HW + 2 * B * S * KKC + 4 * B * Cout * KKC
    bytes_accessed = (patches.size * patches.dtype.itemsize
                      + slab.size * slab.dtype.itemsize
                      + styles.size * 4
                      + B * Cout * HW * x_nchw.dtype.itemsize)

    out = pl.pallas_call(
        kernel,
        out_shape=jax.ShapeDtypeStruct((B, Cout, HW), x_nchw.dtype),
        grid_spec=pltpu.PrefetchScalarGridSpec(
            num_scalar_prefetch=0,
            grid=(batch_blocks,),                      # 1 step (v5e/v6e) or 2 (v7x)
            in_specs=[
                pl.BlockSpec((1, bpb, S), lambda g: (g, 0, 0)),            # styles
                pl.BlockSpec((cfg["slab_rows"], KKC), lambda g: (0, 0)),   # constants
                pl.BlockSpec((bpb, KKC, HW), lambda g: (g, 0, 0)),         # im2col
            ],
            out_specs=pl.BlockSpec((bpb, Cout, HW), lambda g: (g, 0, 0)),
        ),
        compiler_params=pltpu.CompilerParams(
            dimension_semantics=("parallel",),
            # let XLA fuse the im2col producer into the patches input DMA
            allow_input_fusion=[False, False, True],
        ),
        cost_estimate=pl.CostEstimate(
            flops=flops, transcendentals=B * Cout, bytes_accessed=bytes_accessed),
    )(styles3, slab, patches)

    # out is already (B, Cout, H*W) == NCHW flattened; reshape only.
    return out.reshape(B, Cout, H, W)


# ---------------------------------------------------------------------------
# Pure-JAX reference mirroring the PyTorch forward (high-precision f32).
# ---------------------------------------------------------------------------
def _reference(x_nchw, styles, params, *, kernel_size=3, gain=1.0):
    weight, bias = params["weight"], params["bias"]
    wa, ba = params["affine_weight"], params["affine_bias"]
    S = wa.shape[1]
    hp = jax.lax.Precision.HIGHEST
    s = jnp.dot(styles, wa.T, precision=hp) * (1.0 / math.sqrt(S)) + ba   # affine
    w = weight[None] * s[:, None, :, None, None]
    dcoef = jax.lax.rsqrt(jnp.sum(w * w, axis=(2, 3, 4)) + 1e-8)          # (B, Cout)
    xm = x_nchw * s[:, :, None, None]
    pad = kernel_size // 2
    y = jax.lax.conv_general_dilated(
        xm, weight, (1, 1), [(pad, pad), (pad, pad)],
        dimension_numbers=("NCHW", "OIHW", "NCHW"), precision=hp)
    y = y * dcoef[:, :, None, None]
    y = y + bias[None, :, None, None]
    y = jnp.where(y >= 0.0, y, 0.2 * y) * (math.sqrt(2.0) * gain)
    return y


if __name__ == "__main__":
    B, Cin, Cout, S, RES, K = 2, 4, 8, 32, 16, 3

    key = jax.random.PRNGKey(0)
    k_w, k_aw, k_x, k_s, k_b = jax.random.split(key, 5)
    params = {
        "weight": jax.random.normal(k_w, (Cout, Cin, K, K), jnp.float32),
        "bias": 0.1 * jax.random.normal(k_b, (Cout,), jnp.float32),
        "affine_weight": jax.random.normal(k_aw, (Cin, S), jnp.float32),
        "affine_bias": jnp.ones((Cin,), jnp.float32),   # bias_init=1.0
    }
    x = jax.random.normal(k_x, (B, Cin, RES, RES), jnp.float32)
    styles = jax.random.normal(k_s, (B, S), jnp.float32)

    # one-time, call-invariant packing of all constant operands
    slab, cfg = prepare_style_conv2d(params, kernel_size=K)

    fwd_f32 = jax.jit(functools.partial(
        style_conv2d, cfg=cfg, gain=1.0, mxu_dtype=jnp.float32))
    fwd_bf16 = jax.jit(functools.partial(
        style_conv2d, cfg=cfg, gain=1.0, mxu_dtype=jnp.bfloat16))

    ref = jax.block_until_ready(
        _reference(x, styles, params, kernel_size=K, gain=1.0))

    # f32 MXU operands (tolerance covers reduced-precision f32 matmul passes)
    out_f32 = jax.block_until_ready(fwd_f32(x, styles, slab))
    assert out_f32.shape == (B, Cout, RES, RES), out_f32.shape
    assert jnp.allclose(out_f32, ref, rtol=2e-2, atol=2e-2), (
        float(jnp.max(jnp.abs(out_f32 - ref))))

    # default path: bf16 MXU operands, f32 accumulation -> looser tolerance
    out_bf16 = jax.block_until_ready(fwd_bf16(x, styles, slab))
    assert out_bf16.shape == (B, Cout, RES, RES), out_bf16.shape
    assert jnp.allclose(out_bf16, ref, rtol=5e-2, atol=5e-2), (
        float(jnp.max(jnp.abs(out_bf16 - ref))))

    print("KERNEL_OK")
</pallas_src>

<mosaic_0001>
module attributes {stable_mosaic.version = 11 : i64} {
  func.func @_style_conv2d_kernel(%arg0: i32, %arg1: memref<1x2x32xf32, #tpu.memory_space<vmem>>, %arg2: memref<64x36xf32, #tpu.memory_space<vmem>>, %arg3: memref<2x36x256xf32, #tpu.memory_space<vmem>>, %arg4: memref<2x8x256xf32, #tpu.memory_space<vmem>>) attributes {dimension_semantics = [#tpu.dimension_semantics<parallel>], iteration_bounds = array<i64: 1>, scalar_prefetch = 0 : i64, scratch_operands = 0 : i64, tpu.core_type = #tpu.core_type<tc>, window_params = [{transform_indices = @transform_0, window_bounds = array<i64: 1, 2, 32>}, {pipeline_mode = #tpu.pipeline_mode<synchronous>, transform_indices = @transform_1, window_bounds = array<i64: 64, 36>}, {transform_indices = @transform_2, window_bounds = array<i64: 2, 36, 256>}, {transform_indices = @transform_3, window_bounds = array<i64: 2, 8, 256>}]} {
    %c0 = arith.constant 0 : index
    %c0_0 = arith.constant 0 : index
    %0 = vector.load %arg2[%c0, %c0_0] : memref<64x36xf32, #tpu.memory_space<vmem>>, vector<32x36xf32>
    %c32 = arith.constant 32 : index
    %c0_1 = arith.constant 0 : index
    %1 = vector.load %arg2[%c32, %c0_1] : memref<64x36xf32, #tpu.memory_space<vmem>>, vector<1x36xf32>
    %c40 = arith.constant 40 : index
    %c0_2 = arith.constant 0 : index
    %2 = vector.load %arg2[%c40, %c0_2] : memref<64x36xf32, #tpu.memory_space<vmem>>, vector<8x36xf32>
    %c48 = arith.constant 48 : index
    %c0_3 = arith.constant 0 : index
    %3 = vector.load %arg2[%c48, %c0_3] : memref<64x36xf32, #tpu.memory_space<vmem>>, vector<8x36xf32>
    %c56 = arith.constant 56 : index
    %c0_4 = arith.constant 0 : index
    %4 = vector.load %arg2[%c56, %c0_4] : memref<64x36xf32, #tpu.memory_space<vmem>>, vector<8x1xf32>
    %c0_5 = arith.constant 0 : index
    %c0_6 = arith.constant 0 : index
    %c0_7 = arith.constant 0 : index
    %5 = vector.load %arg1[%c0_5, %c0_6, %c0_7] : memref<1x2x32xf32, #tpu.memory_space<vmem>>, vector<1x2x32xf32>
    %6 = vector.shape_cast %5 : vector<1x2x32xf32> to vector<2x32xf32>
    %cst = arith.constant dense<0.000000e+00> : vector<2x36xf32>
    %7 = tpu.matmul %6, %0, %cst {dimension_numbers = #tpu.dot_dimension_numbers<[1], [0], [0], [1], [0, 0, 1, 1], [], []>} : vector<2x32xf32>, vector<32x36xf32>, vector<2x36xf32> -> vector<2x36xf32>
    %8 = vector.broadcast %1 : vector<1x36xf32> to vector<2x36xf32>
    %9 = arith.addf %7, %8 : vector<2x36xf32>
    %10 = vector.shape_cast %4 : vector<8x1xf32> to vector<8x1xf32>
    %11 = vector.broadcast %10 : vector<8x1xf32> to vector<8x256xf32>
    %12 = vector.extract_strided_slice %9 {offsets = [0, 0], sizes = [1, 36], strides = [1, 1]} : vector<2x36xf32> to vector<1x36xf32>
    %13 = arith.mulf %12, %12 : vector<1x36xf32>
    %14 = vector.broadcast %13 : vector<1x36xf32> to vector<8x36xf32>
    %15 = arith.mulf %3, %14 : vector<8x36xf32>
    %cst_8 = arith.constant dense<0.000000e+00> : vector<8xf32>
    %16 = vector.multi_reduction <add>, %15, %cst_8 [1] : vector<8x36xf32> to vector<8xf32>
    %17 = vector.shape_cast %16 : vector<8xf32> to vector<8x1xf32>
    %cst_9 = arith.constant 9.99999993E-9 : f32
    %18 = vector.broadcast %cst_9 : f32 to vector<8x1xf32>
    %19 = arith.addf %17, %18 : vector<8x1xf32>
    %20 = math.rsqrt %19 : vector<8x1xf32>
    %21 = vector.broadcast %12 : vector<1x36xf32> to vector<8x36xf32>
    %22 = arith.mulf %2, %21 : vector<8x36xf32>
    %23 = vector.broadcast %20 : vector<8x1xf32> to vector<8x36xf32>
    %24 = arith.mulf %22, %23 : vector<8x36xf32>
    %c0_10 = arith.constant 0 : index
    %c0_11 = arith.constant 0 : index
    %c0_12 = arith.constant 0 : index
    %25 = vector.load %arg3[%c0_10, %c0_11, %c0_12] : memref<2x36x256xf32, #tpu.memory_space<vmem>>, vector<1x36x256xf32>
    %26 = vector.shape_cast %25 : vector<1x36x256xf32> to vector<36x256xf32>
    %cst_13 = arith.constant dense<0.000000e+00> : vector<8x256xf32>
    %27 = tpu.matmul %24, %26, %cst_13 {dimension_numbers = #tpu.dot_dimension_numbers<[1], [0], [0], [1], [0, 0, 1, 1], [], []>} : vector<8x36xf32>, vector<36x256xf32>, vector<8x256xf32> -> vector<8x256xf32>
    %28 = arith.addf %27, %11 : vector<8x256xf32>
    %cst_14 = arith.constant 0.000000e+00 : f32
    %29 = vector.broadcast %cst_14 : f32 to vector<8x256xf32>
    %30 = arith.cmpf oge, %28, %29 : vector<8x256xf32>
    %cst_15 = arith.constant 1.41421354 : f32
    %cst_16 = arith.constant 0.282842726 : f32
    %31 = vector.broadcast %cst_15 : f32 to vector<8x256xf32>
    %32 = vector.broadcast %cst_16 : f32 to vector<8x256xf32>
    %33 = arith.select %30, %31, %32 : vector<8x256xi1>, vector<8x256xf32>
    %34 = arith.mulf %28, %33 : vector<8x256xf32>
    %c0_17 = arith.constant 0 : index
    %c0_18 = arith.constant 0 : index
    %c0_19 = arith.constant 0 : index
    %35 = vector.load %arg4[%c0_17, %c0_18, %c0_19] : memref<2x8x256xf32, #tpu.memory_space<vmem>>, vector<1x8x256xf32>
    %36 = vector.shape_cast %35 : vector<1x8x256xf32> to vector<8x256xf32>
    %37 = vector.shape_cast %34 : vector<8x256xf32> to vector<1x8x256xf32>
    tpu.vector_store %arg4[%c0_17, %c0_18, %c0_19], %37 {strides = array<i32>} : memref<2x8x256xf32, #tpu.memory_space<vmem>>, vector<1x8x256xf32>,
    %38 = vector.extract_strided_slice %9 {offsets = [1, 0], sizes = [1, 36], strides = [1, 1]} : vector<2x36xf32> to vector<1x36xf32>
    %39 = arith.mulf %38, %38 : vector<1x36xf32>
    %40 = vector.broadcast %39 : vector<1x36xf32> to vector<8x36xf32>
    %41 = arith.mulf %3, %40 : vector<8x36xf32>
    %cst_20 = arith.constant dense<0.000000e+00> : vector<8xf32>
    %42 = vector.multi_reduction <add>, %41, %cst_20 [1] : vector<8x36xf32> to vector<8xf32>
    %43 = vector.shape_cast %42 : vector<8xf32> to vector<8x1xf32>
    %cst_21 = arith.constant 9.99999993E-9 : f32
    %44 = vector.broadcast %cst_21 : f32 to vector<8x1xf32>
    %45 = arith.addf %43, %44 : vector<8x1xf32>
    %46 = math.rsqrt %45 : vector<8x1xf32>
    %47 = vector.broadcast %38 : vector<1x36xf32> to vector<8x36xf32>
    %48 = arith.mulf %2, %47 : vector<8x36xf32>
    %49 = vector.broadcast %46 : vector<8x1xf32> to vector<8x36xf32>
    %50 = arith.mulf %48, %49 : vector<8x36xf32>
    %c1 = arith.constant 1 : index
    %c0_22 = arith.constant 0 : index
    %c0_23 = arith.constant 0 : index
    %51 = vector.load %arg3[%c1, %c0_22, %c0_23] : memref<2x36x256xf32, #tpu.memory_space<vmem>>, vector<1x36x256xf32>
    %52 = vector.shape_cast %51 : vector<1x36x256xf32> to vector<36x256xf32>
    %cst_24 = arith.constant dense<0.000000e+00> : vector<8x256xf32>
    %53 = tpu.matmul %50, %52, %cst_24 {dimension_numbers = #tpu.dot_dimension_numbers<[1], [0], [0], [1], [0, 0, 1, 1], [], []>} : vector<8x36xf32>, vector<36x256xf32>, vector<8x256xf32> -> vector<8x256xf32>
    %54 = arith.addf %53, %11 : vector<8x256xf32>
    %cst_25 = arith.constant 0.000000e+00 : f32
    %55 = vector.broadcast %cst_25 : f32 to vector<8x256xf32>
    %56 = arith.cmpf oge, %54, %55 : vector<8x256xf32>
    %cst_26 = arith.constant 1.41421354 : f32
    %cst_27 = arith.constant 0.282842726 : f32
    %57 = vector.broadcast %cst_26 : f32 to vector<8x256xf32>
    %58 = vector.broadcast %cst_27 : f32 to vector<8x256xf32>
    %59 = arith.select %56, %57, %58 : vector<8x256xi1>, vector<8x256xf32>
    %60 = arith.mulf %54, %59 : vector<8x256xf32>
    %c1_28 = arith.constant 1 : index
    %c0_29 = arith.constant 0 : index
    %c0_30 = arith.constant 0 : index
    %61 = vector.load %arg4[%c1_28, %c0_29, %c0_30] : memref<2x8x256xf32, #tpu.memory_space<vmem>>, vector<1x8x256xf32>
    %62 = vector.shape_cast %61 : vector<1x8x256xf32> to vector<8x256xf32>
    %63 = vector.shape_cast %60 : vector<8x256xf32> to vector<1x8x256xf32>
    tpu.vector_store %arg4[%c1_28, %c0_29, %c0_30], %63 {strides = array<i32>} : memref<2x8x256xf32, #tpu.memory_space<vmem>>, vector<1x8x256xf32>,
    return
  }
  func.func @transform_0(%arg0: i32) -> (i32, i32, i32) {
    %c0_i32 = arith.constant 0 : i32
    %c0_i32_0 = arith.constant 0 : i32
    %c0_i32_1 = arith.constant 0 : i32
    return %arg0, %c0_i32, %c0_i32_0 : i32, i32, i32
  }
  func.func @transform_1(%arg0: i32) -> (i32, i32) {
    %c0_i32 = arith.constant 0 : i32
    %c0_i32_0 = arith.constant 0 : i32
    %c0_i32_1 = arith.constant 0 : i32
    return %c0_i32, %c0_i32_0 : i32, i32
  }
  func.func @transform_2(%arg0: i32) -> (i32, i32, i32) {
    %c0_i32 = arith.constant 0 : i32
    %c0_i32_0 = arith.constant 0 : i32
    %c0_i32_1 = arith.constant 0 : i32
    return %arg0, %c0_i32, %c0_i32_0 : i32, i32, i32
  }
  func.func @transform_3(%arg0: i32) -> (i32, i32, i32) {
    %c0_i32 = arith.constant 0 : i32
    %c0_i32_0 = arith.constant 0 : i32
    %c0_i32_1 = arith.constant 0 : i32
    return %arg0, %c0_i32, %c0_i32_0 : i32, i32, i32
  }
}

</mosaic_0001>

<llo_original>
// kernel: style_conv2d.1
$region0: #{style_conv2d.1}
  #allocation0 [shape = 'u32[]', space=smem, size = 0x4, offset = 0x4, fixed_abs, tag = 'smem constant byte address 0x4 - core index']
  #allocation1 [shape = 'u32[144,128]{1,0:T(1,128)}', space=vmem, size = 0x12000, scoped, tag = 'internal scratch']
  %s0 = inlined_call_operand.vmem [shape: f32[1,2,32], index: 0, kind: input, shape index: {}]
  %s1 = inlined_call_operand.vmem [shape: f32[64,36], index: 1, kind: input, shape index: {}]
  %s2 = inlined_call_operand.vmem [shape: f32[2,36,256], index: 2, kind: input, shape index: {}]
  %s3 = inlined_call_operand.vmem [shape: f32[2,8,256], index: 3, kind: output, shape index: {}]
  %s4 = sld [smem:[#allocation0]]
  $region22: #{style_conv2d.1} parent=0
    _
  %s6 = ssub.s32 1, %s4
  %s7 = scalar_select 0, %s6, %s4
  // Predicated region
  $region2: #{style_conv2d.1} parent=0 // pred_check
    _
  $region3: #{style_conv2d.1} parent=0 // pred_check_branch
    %9 = sbr.rel (0) target = $region5
  $region4: #{style_conv2d.1} parent=0 // pred_region
    _
  $region5: #{style_conv2d.1} parent=0 // pred_fallthru
    _
  // Predicated region
  $region6: #{style_conv2d.1} parent=0 // pred_check
    _
  $region7: #{style_conv2d.1} parent=0 // pred_check_branch
    %11 = sbr.rel (0) target = $region9
  $region8: #{style_conv2d.1} parent=0 // pred_region
    _
  $region9: #{style_conv2d.1} parent=0 // pred_fallthru
    _
  // Predicated region
  $region10: #{style_conv2d.1} parent=0 // pred_check
    _
  $region11: #{style_conv2d.1} parent=0 // pred_check_branch
    %13 = sbr.rel (0) target = $region13
  $region12: #{style_conv2d.1} parent=0 // pred_region
    _
  $region13: #{style_conv2d.1} parent=0 // pred_fallthru
    _
  %v14 = vld [vmem:[%s1] sm:$0xff]
  %v15 = vld [vmem:[%s1 + $0x8] sm:$0xff]
  %v16 = vld [vmem:[%s1 + $0x10] sm:$0xff]
  %v17 = vld [vmem:[%s1 + $0x18] sm:$0xff]
  %v18 = vld [vmem:[%s1 + $0x20] sm:$0x1]
  %v19 = vld [vmem:[%s1 + $0x28] sm:$0xff]
  %v20 = vld [vmem:[%s1 + $0x30] sm:$0xff]
  %v21 = vld [vmem:[%s1 + $0x38] sm:$0xff]
  %v22 = vld [vmem:[%s0] sm:$0x3]
  %v23 = vlaneseq
  %v24 = vshrl.u32 %v23, 7
  %v25 = vsub.s32 0, %v24
  %v26 = vrot.slane %v18, %v25
  %vm27 = vcmask 261120
  %v29 = vsel %vm27, %v22, 0
  %31 = vmatprep.subr.mxu0 0.0
  %32 = vmatpush1.msra.mxu0 %v14
  %33 = vmatprep.subr.mxu0 0.0
  %34 = vmatpush1.msra.mxu0 %v15
  %35 = vmatprep.subr.mxu0 0.0
  %36 = vmatpush1.msra.mxu0 %v16
  %37 = vmatprep.subr.mxu0 0.0
  %38 = vmatpush1.msra.mxu0 %v17
  %39 = vmatprep.subr.mxu0 0.0
  %40 = vmatpush1.msra.mxu0 0.0
  %41 = vmatprep.subr.mxu0 0.0
  %42 = vmatpush1.msra.mxu0 0.0
  %43 = vmatprep.subr.mxu0 0.0
  %44 = vmatpush1.msra.mxu0 0.0
  %45 = vmatprep.subr.mxu0 0.0
  %46 = vmatpush1.msra.mxu0 0.0
  %47 = vmatprep.subr.mxu0 0.0
  %48 = vmatpush1.msra.mxu0 0.0
  %49 = vmatprep.subr.mxu0 0.0
  %50 = vmatpush1.msra.mxu0 0.0
  %51 = vmatprep.subr.mxu0 0.0
  %52 = vmatpush1.msra.mxu0 0.0
  %53 = vmatprep.subr.mxu0 0.0
  %54 = vmatpush1.msra.mxu0 0.0
  %55 = vmatprep.subr.mxu0 0.0
  %56 = vmatpush1.msra.mxu0 0.0
  %57 = vmatprep.subr.mxu0 0.0
  %58 = vmatpush1.msra.mxu0 0.0
  %59 = vmatprep.subr.mxu0 0.0
  %60 = vmatpush1.msra.mxu0 0.0
  %61 = vmatprep.subr.mxu0 0.0
  %62 = vmatpush1.msra.mxu0 0.0
  %63 = vmatprep.subr.mxu0 0.0
  %64 = vmatpush1.msra.mxu0 0.0
  %65 = vmatprep.subr.mxu0 0.0
  %66 = vmatpush1.msra.mxu0 0.0
  %67 = vmatprep.subr.mxu0 0.0
  %68 = vmatpush1.msra.mxu0 0.0
  %69 = vmatprep.subr.mxu0 0.0
  %70 = vmatpush1.msra.mxu0 0.0
  %71 = vmatprep.subr.mxu0 0.0
  %72 = vmatpush1.msra.mxu0 0.0
  %73 = vmatprep.subr.mxu0 0.0
  %74 = vmatpush1.msra.mxu0 0.0
  %75 = vmatprep.subr.mxu0 0.0
  %76 = vmatpush1.msra.mxu0 0.0
  %77 = vmatprep.subr.mxu0 0.0
  %78 = vmatpush1.msra.mxu0 0.0
  %79 = vmatprep.subr.mxu0 0.0
  %80 = vmatpush1.msra.mxu0 0.0
  %81 = vmatprep.subr.mxu0 0.0
  %82 = vmatpush1.msra.mxu0 0.0
  %83 = vmatprep.subr.mxu0 0.0
  %84 = vmatpush1.msra.mxu0 0.0
  %85 = vmatprep.subr.mxu0 0.0
  %86 = vmatpush1.msra.mxu0 0.0
  %87 = vmatprep.subr.mxu0 0.0
  %88 = vmatpush1.msra.mxu0 0.0
  %89 = vmatprep.subr.mxu0 0.0
  %90 = vmatpush1.msra.mxu0 0.0
  %91 = vmatprep.subr.mxu0 0.0
  %92 = vmatpush1.msra.mxu0 0.0
  %93 = vmatprep.subr.mxu0 0.0
  %94 = vmatpush1.msra.mxu0 0.0
  %95 = vmatprep.mubr.f32.mxu0 0.0
  %96 = vmatmul.mubr.f32.gmra.mrb[0].mxu0 %v29
  %v97 = vpop.f32.mrb[0].mxu0
  %v98 = vadd.f32 %v26, %v97
  %v99 = vpop.f32.mrb[0].mxu0
  %100 = vdwg.mxu0
  %102 = vset.pattern.permute.xlu0 0
  %103 = vperm.xlu0 %102, %v21
  %v104 = vpop.permute.xlu0 %103
  %v106 = vmul.f32 %v98, %v98
  %v107 = vlaneseq
  %v108 = vshrl.u32 %v107, 7
  %v109 = vsub.s32 0, %v108
  %v110 = vrot.slane %v106, %v109
  %v111 = vmul.f32 %v20, %v110
  %vm112 = vcmask 293888
  %v113 = vsel %vm112, %v111, 0.0
  %114 = vadd.xlane.f32.xlu0 %v113
  %v115 = vpop.xlane.xlu0 %114
  %v116 = vadd.f32 %v115, 1e-08
  %v117 = vrsqrt.pop %v116
  %v118 = vlaneseq
  %v119 = vshrl.u32 %v118, 7
  %v120 = vsub.s32 0, %v119
  %v121 = vrot.slane %v98, %v120
  %v122 = vmul.f32 %v19, %v121
  %v123 = vmul.f32 %v122, %v117
  %v124 = vld [vmem:[%s2] sm:$0xff]
  %v125 = vld [vmem:[%s2 + $0x8] sm:$0xff]
  %v126 = vld [vmem:[%s2 + $0x10] sm:$0xff]
  %v127 = vld [vmem:[%s2 + $0x18] sm:$0xff]
  %v128 = vld [vmem:[%s2 + $0x20] sm:$0xff]
  %v129 = vld [vmem:[%s2 + $0x28] sm:$0xff]
  %v130 = vld [vmem:[%s2 + $0x30] sm:$0xff]
  %v131 = vld [vmem:[%s2 + $0x38] sm:$0xff]
  %v132 = vld [vmem:[%s2 + $0x40] sm:$0xf]
  %v133 = vld [vmem:[%s2 + $0x48] sm:$0xf]
  %v135 = vsel %vm112, %v123, 0
  %vm137 = vcmask 1043456
  %v139 = vsel %vm137, %v132, 0
  %v142 = vsel %vm137, %v133, 0
  %144 = vmatprep.subr.mxu0 %v125
  %145 = vmatpush1.msra.mxu0 %v124
  %146 = vmatprep.subr.mxu0 %v127
  %147 = vmatpush1.msra.mxu0 %v126
  %148 = vmatprep.subr.mxu0 %v129
  %149 = vmatpush1.msra.mxu0 %v128
  %150 = vmatprep.subr.mxu0 %v131
  %151 = vmatpush1.msra.mxu0 %v130
  %152 = vmatprep.subr.mxu0 %v142
  %153 = vmatpush1.msra.mxu0 %v139
  %154 = vmatprep.subr.mxu0 0.0
  %155 = vmatpush1.msra.mxu0 0.0
  %156 = vmatprep.subr.mxu0 0.0
  %157 = vmatpush1.msra.mxu0 0.0
  %158 = vmatprep.subr.mxu0 0.0
  %159 = vmatpush1.msra.mxu0 0.0
  %160 = vmatprep.subr.mxu0 0.0
  %161 = vmatpush1.msra.mxu0 0.0
  %162 = vmatprep.subr.mxu0 0.0
  %163 = vmatpush1.msra.mxu0 0.0
  %164 = vmatprep.subr.mxu0 0.0
  %165 = vmatpush1.msra.mxu0 0.0
  %166 = vmatprep.subr.mxu0 0.0
  %167 = vmatpush1.msra.mxu0 0.0
  %168 = vmatprep.subr.mxu0 0.0
  %169 = vmatpush1.msra.mxu0 0.0
  %170 = vmatprep.subr.mxu0 0.0
  %171 = vmatpush1.msra.mxu0 0.0
  %172 = vmatprep.subr.mxu0 0.0
  %173 = vmatpush1.msra.mxu0 0.0
  %174 = vmatprep.subr.mxu0 0.0
  %175 = vmatpush1.msra.mxu0 0.0
  %176 = vmatprep.subr.mxu0 0.0
  %177 = vmatpush1.msra.mxu0 0.0
  %178 = vmatprep.subr.mxu0 0.0
  %179 = vmatpush1.msra.mxu0 0.0
  %180 = vmatprep.subr.mxu0 0.0
  %181 = vmatpush1.msra.mxu0 0.0
  %182 = vmatprep.subr.mxu0 0.0
  %183 = vmatpush1.msra.mxu0 0.0
  %184 = vmatprep.subr.mxu0 0.0
  %185 = vmatpush1.msra.mxu0 0.0
  %186 = vmatprep.subr.mxu0 0.0
  %187 = vmatpush1.msra.mxu0 0.0
  %188 = vmatprep.subr.mxu0 0.0
  %189 = vmatpush1.msra.mxu0 0.0
  %190 = vmatprep.subr.mxu0 0.0
  %191 = vmatpush1.msra.mxu0 0.0
  %192 = vmatprep.subr.mxu0 0.0
  %193 = vmatpush1.msra.mxu0 0.0
  %194 = vmatprep.subr.mxu0 0.0
  %195 = vmatpush1.msra.mxu0 0.0
  %196 = vmatprep.subr.mxu0 0.0
  %197 = vmatpush1.msra.mxu0 0.0
  %198 = vmatprep.subr.mxu0 0.0
  %199 = vmatpush1.msra.mxu0 0.0
  %200 = vmatprep.subr.mxu0 0.0
  %201 = vmatpush1.msra.mxu0 0.0
  %202 = vmatprep.subr.mxu0 0.0
  %203 = vmatpush1.msra.mxu0 0.0
  %204 = vmatprep.subr.mxu0 0.0
  %205 = vmatpush1.msra.mxu0 0.0
  %206 = vmatprep.subr.mxu0 0.0
  %207 = vmatpush1.msra.mxu0 0.0
  %208 = vmatprep.mubr.f32.mxu0 0.0
  %209 = vmatmul.mubr.f32.gmra.mrb[0].mxu0 %v135
  %v210 = vpop.f32.mrb[0].mxu0
  %v211 = vadd.f32 %v104, %v210
  %v212 = vpop.f32.mrb[0].mxu0
  %v213 = vadd.f32 %v104, %v212
  %214 = vdwg.mxu0
  %vm215 = vcmp.ge.f32.partialorder %v211, 0.0
  %vm216 = vcmp.ge.f32.partialorder %v213, 0.0
  %v217 = vsel %vm215, 1.4142135, 0.28284273
  %v218 = vsel %vm216, 1.4142135, 0.28284273
  %v219 = vmul.f32 %v211, %v217
  %v220 = vmul.f32 %v213, %v218
  %221 = vst [vmem:[%s3] sm:$0xff] %v219
  %222 = vst [vmem:[%s3 + $0x8] sm:$0xff] %v220
  %v223 = vlaneseq
  %v224 = vshrl.u32 %v223, 7
  %v225 = vsub.s32 1, %v224
  %v226 = vrot.slane %v106, %v225
  %v227 = vmul.f32 %v20, %v226
  %v228 = vsel %vm112, %v227, 0.0
  %229 = vadd.xlane.f32.xlu0 %v228
  %v230 = vpop.xlane.xlu0 %229
  %v231 = vadd.f32 %v230, 1e-08
  %v232 = vrsqrt.pop %v231
  %v233 = vlaneseq
  %v234 = vshrl.u32 %v233, 7
  %v235 = vsub.s32 1, %v234
  %v236 = vrot.slane %v98, %v235
  %v237 = vmul.f32 %v19, %v236
  %v238 = vmul.f32 %v237, %v232
  %s239 = scalar_lea.vmem %s2, 80
  %v240 = vld [vmem:[%s239] sm:$0xff]
  %v241 = vld [vmem:[%s239 + $0x8] sm:$0xff]
  %v242 = vld [vmem:[%s239 + $0x10] sm:$0xff]
  %v243 = vld [vmem:[%s239 + $0x18] sm:$0xff]
  %v244 = vld [vmem:[%s239 + $0x20] sm:$0xff]
  %v245 = vld [vmem:[%s239 + $0x28] sm:$0xff]
  %v246 = vld [vmem:[%s239 + $0x30] sm:$0xff]
  %v247 = vld [vmem:[%s239 + $0x38] sm:$0xff]
  %v248 = vld [vmem:[%s239 + $0x40] sm:$0xf]
  %v249 = vld [vmem:[%s239 + $0x48] sm:$0xf]
  %v251 = vsel %vm112, %v238, 0
  %v254 = vsel %vm137, %v248, 0
  %v257 = vsel %vm137, %v249, 0
  %259 = vmatprep.subr.mxu0 %v241
  %260 = vmatpush1.msra.mxu0 %v240
  %261 = vmatprep.subr.mxu0 %v243
  %262 = vmatpush1.msra.mxu0 %v242
  %263 = vmatprep.subr.mxu0 %v245
  %264 = vmatpush1.msra.mxu0 %v244
  %265 = vmatprep.subr.mxu0 %v247
  %266 = vmatpush1.msra.mxu0 %v246
  %267 = vmatprep.subr.mxu0 %v257
  %268 = vmatpush1.msra.mxu0 %v254
  %269 = vmatprep.subr.mxu0 0.0
  %270 = vmatpush1.msra.mxu0 0.0
  %271 = vmatprep.subr.mxu0 0.0
  %272 = vmatpush1.msra.mxu0 0.0
  %273 = vmatprep.subr.mxu0 0.0
  %274 = vmatpush1.msra.mxu0 0.0
  %275 = vmatprep.subr.mxu0 0.0
  %276 = vmatpush1.msra.mxu0 0.0
  %277 = vmatprep.subr.mxu0 0.0
  %278 = vmatpush1.msra.mxu0 0.0
  %279 = vmatprep.subr.mxu0 0.0
  %280 = vmatpush1.msra.mxu0 0.0
  %281 = vmatprep.subr.mxu0 0.0
  %282 = vmatpush1.msra.mxu0 0.0
  %283 = vmatprep.subr.mxu0 0.0
  %284 = vmatpush1.msra.mxu0 0.0
  %285 = vmatprep.subr.mxu0 0.0
  %286 = vmatpush1.msra.mxu0 0.0
  %287 = vmatprep.subr.mxu0 0.0
  %288 = vmatpush1.msra.mxu0 0.0
  %289 = vmatprep.subr.mxu0 0.0
  %290 = vmatpush1.msra.mxu0 0.0
  %291 = vmatprep.subr.mxu0 0.0
  %292 = vmatpush1.msra.mxu0 0.0
  %293 = vmatprep.subr.mxu0 0.0
  %294 = vmatpush1.msra.mxu0 0.0
  %295 = vmatprep.subr.mxu0 0.0
  %296 = vmatpush1.msra.mxu0 0.0
  %297 = vmatprep.subr.mxu0 0.0
  %298 = vmatpush1.msra.mxu0 0.0
  %299 = vmatprep.subr.mxu0 0.0
  %300 = vmatpush1.msra.mxu0 0.0
  %301 = vmatprep.subr.mxu0 0.0
  %302 = vmatpush1.msra.mxu0 0.0
  %303 = vmatprep.subr.mxu0 0.0
  %304 = vmatpush1.msra.mxu0 0.0
  %305 = vmatprep.subr.mxu0 0.0
  %306 = vmatpush1.msra.mxu0 0.0
  %307 = vmatprep.subr.mxu0 0.0
  %308 = vmatpush1.msra.mxu0 0.0
  %309 = vmatprep.subr.mxu0 0.0
  %310 = vmatpush1.msra.mxu0 0.0
  %311 = vmatprep.subr.mxu0 0.0
  %312 = vmatpush1.msra.mxu0 0.0
  %313 = vmatprep.subr.mxu0 0.0
  %314 = vmatpush1.msra.mxu0 0.0
  %315 = vmatprep.subr.mxu0 0.0
  %316 = vmatpush1.msra.mxu0 0.0
  %317 = vmatprep.subr.mxu0 0.0
  %318 = vmatpush1.msra.mxu0 0.0
  %319 = vmatprep.subr.mxu0 0.0
  %320 = vmatpush1.msra.mxu0 0.0
  %321 = vmatprep.subr.mxu0 0.0
  %322 = vmatpush1.msra.mxu0 0.0
  %323 = vmatprep.mubr.f32.mxu0 0.0
  %324 = vmatmul.mubr.f32.gmra.mrb[0].mxu0 %v251
  %v325 = vpop.f32.mrb[0].mxu0
  %v326 = vadd.f32 %v104, %v325
  %v327 = vpop.f32.mrb[0].mxu0
  %v328 = vadd.f32 %v104, %v327
  %329 = vdwg.mxu0
  %vm330 = vcmp.ge.f32.partialorder %v326, 0.0
  %vm331 = vcmp.ge.f32.partialorder %v328, 0.0
  %v332 = vsel %vm330, 1.4142135, 0.28284273
  %v333 = vsel %vm331, 1.4142135, 0.28284273
  %v334 = vmul.f32 %v326, %v332
  %v335 = vmul.f32 %v328, %v333
  %s336 = scalar_lea.vmem %s3, 16
  %337 = vst [vmem:[%s336] sm:$0xff] %v334
  %338 = vst [vmem:[%s336 + $0x8] sm:$0xff] %v335
  // Predicated region
  $region14: #{style_conv2d.1} parent=0 // pred_check
    _
  $region15: #{style_conv2d.1} parent=0 // pred_check_branch
    %340 = sbr.rel (0) target = $region17
  $region16: #{style_conv2d.1} parent=0 // pred_region
    _
  $region17: #{style_conv2d.1} parent=0 // pred_fallthru
    _
  // Predicated region
  $region18: #{style_conv2d.1} parent=0 // pred_check
    _
  $region19: #{style_conv2d.1} parent=0 // pred_check_branch
    %342 = sbr.rel (0) target = $region21
  $region20: #{style_conv2d.1} parent=0 // pred_region
    _
  $region21: #{style_conv2d.1} parent=0 // pred_fallthru
    _

</llo_original>
